<compile_context>
chip_gen: v7x
topology: tpu7x:2x2x1
jax: 0.10.0
libtpu: 0.0.40
codegen_flags: <defaults>
</compile_context>

<pallas_src>
import functools

import jax
import jax.numpy as jnp
from jax import lax
from jax.experimental import pallas as pl
from jax.experimental.pallas import tpu as pltpu


def _lsoftmax_kernel(x_ref, theta_ref, tgt_ref, loss_ref, acc_ref, *, batch, tile):
    i = pl.program_id(0)

    @pl.when(i == 0)
    def _init():
        acc_ref[...] = jnp.zeros_like(acc_ref)

    x = x_ref[...].astype(jnp.float32)          # (tile, C)
    theta = theta_ref[...].astype(jnp.float32)  # (C, K)
    tgt = tgt_ref[...]                          # (tile, 1) int32

    # Fused row normalization: (x / ||x||) @ theta == (x @ theta) * rsqrt(sum x^2).
    inv_norm = lax.rsqrt(jnp.sum(x * x, axis=1, keepdims=True))                 # (tile, 1)
    logits = jnp.dot(x, theta, preferred_element_type=jnp.float32) * inv_norm   # (tile, K)

    # Cross entropy (mean over batch): logsumexp(logits) - logits[target].
    m = jnp.max(logits, axis=1, keepdims=True)                                  # (tile, 1)
    lse = m + jnp.log(jnp.sum(jnp.exp(logits - m), axis=1, keepdims=True))      # (tile, 1)

    # Gather the target logit via a lane mask (targets assumed in [0, K-1],
    # same contract as torch.nn.CrossEntropyLoss).
    col_ids = lax.broadcasted_iota(jnp.int32, logits.shape, 1)                  # (tile, K)
    picked = jnp.sum(jnp.where(col_ids == tgt, logits, 0.0),
                     axis=1, keepdims=True)                                     # (tile, 1)

    # Mask out padded rows of a partial last tile.
    row_ids = i * tile + lax.broadcasted_iota(jnp.int32, (tile, 1), 0)
    contrib = jnp.where(row_ids < batch, lse - picked, 0.0)                     # (tile, 1)

    # Resident (1,1) VMEM accumulator across the batch grid axis.
    acc_ref[...] += jnp.sum(contrib, keepdims=True)

    @pl.when(i == pl.num_programs(0) - 1)
    def _finalize():
        loss_ref[...] = acc_ref[...] / jnp.float32(batch)


def lsoftmax_loss(x, theta, target, *, block_batch=None):
    """x: (B, C) f32, theta: (C, C-1) f32, target: (B,) int in [0, C-2] -> scalar loss."""
    B, C = x.shape
    K = theta.shape[1]
    assert theta.shape == (C, K)

    if block_batch is None:
        tm = B if B <= 512 else 512          # whole batch if small, else 512-row tiles
    else:
        tm = int(block_batch)
    if tm != B:
        assert tm % 8 == 0, "batch tile must be a multiple of 8 unless it equals B"
    num_tiles = pl.cdiv(B, tm)

    tgt2d = target.reshape(B, 1).astype(jnp.int32)
    kernel = functools.partial(_lsoftmax_kernel, batch=B, tile=tm)

    out = pl.pallas_call(
        kernel,
        out_shape=jax.ShapeDtypeStruct((1, 1), jnp.float32),
        grid=(num_tiles,),
        in_specs=[
            pl.BlockSpec((tm, C), lambda i: (i, 0)),   # x tile
            pl.BlockSpec((C, K), lambda i: (0, 0)),    # theta (resident, DMA'd once)
            pl.BlockSpec((tm, 1), lambda i: (i, 0)),   # per-tile targets
        ],
        out_specs=pl.BlockSpec((1, 1), lambda i: (0, 0)),
        scratch_shapes=[pltpu.VMEM((1, 1), jnp.float32)],
        compiler_params=pltpu.CompilerParams(
            # Shared accumulator across batch tiles -> reduction axis is "arbitrary".
            dimension_semantics=("arbitrary",),
        ),
    )(x, theta, tgt2d)
    return out[0, 0]


def _reference(x, theta, target):
    xn = x / jnp.linalg.norm(x, axis=1, keepdims=True)
    logits = xn @ theta
    lse = jax.scipy.special.logsumexp(logits, axis=1)
    picked = logits[jnp.arange(x.shape[0]), target]
    return jnp.mean(lse - picked)


if __name__ == "__main__":
    num_classes = 7
    batch = 16  # small; block_batch=8 exercises the 2-step accumulating grid

    key = jax.random.PRNGKey(0)
    k_x, k_t, k_theta = jax.random.split(key, 3)

    x = jax.random.normal(k_x, (batch, num_classes), dtype=jnp.float32)
    # CrossEntropyLoss is over num_classes-1 logits -> valid targets in [0, num_classes-2].
    target = jax.random.randint(k_t, (batch,), 0, num_classes - 1, dtype=jnp.int32)

    # Deterministic kaiming_uniform-like init for theta (num_classes, num_classes-1):
    # bound = sqrt(6 / fan_in) with fan_in = num_classes - 1.
    fan_in = num_classes - 1
    bound = (6.0 / fan_in) ** 0.5
    theta = jax.random.uniform(
        k_theta, (num_classes, num_classes - 1), dtype=jnp.float32,
        minval=-bound, maxval=bound)

    loss = lsoftmax_loss(x, theta, target, block_batch=8)
    loss = jax.block_until_ready(loss)

    ref = _reference(x, theta, target)
    assert jnp.allclose(loss, ref, atol=1e-5, rtol=1e-5), (loss, ref)

    print("KERNEL_OK")
</pallas_src>

<mosaic_0001>
module attributes {stable_mosaic.version = 11 : i64} {
  func.func @_lsoftmax_kernel(%arg0: i32, %arg1: memref<8x7xf32, #tpu.memory_space<vmem>>, %arg2: memref<7x6xf32, #tpu.memory_space<vmem>>, %arg3: memref<8x1xi32, #tpu.memory_space<vmem>>, %arg4: memref<1x1xf32, #tpu.memory_space<vmem>>, %arg5: memref<1x1xf32, #tpu.memory_space<vmem>>) attributes {dimension_semantics = [#tpu.dimension_semantics<arbitrary>], iteration_bounds = array<i64: 2>, scalar_prefetch = 0 : i64, scratch_operands = 1 : i64, tpu.core_type = #tpu.core_type<tc>, window_params = [{transform_indices = @transform_0, window_bounds = array<i64: 8, 7>}, {pipeline_mode = #tpu.pipeline_mode<synchronous>, transform_indices = @transform_1, window_bounds = array<i64: 7, 6>}, {transform_indices = @transform_2, window_bounds = array<i64: 8, 1>}, {pipeline_mode = #tpu.pipeline_mode<synchronous>, transform_indices = @transform_3, window_bounds = array<i64: 1, 1>}]} {
    %c0_i32 = arith.constant 0 : i32
    %0 = arith.cmpi eq, %arg0, %c0_i32 : i32
    %1 = arith.extui %0 : i1 to i32
    %c0_i32_0 = arith.constant 0 : i32
    %2 = arith.cmpi ne, %1, %c0_i32_0 : i32
    scf.if %2 {
      %cst_18 = arith.constant 0.000000e+00 : f32
      %49 = vector.broadcast %cst_18 : f32 to vector<1x1xf32>
      %c0_19 = arith.constant 0 : index
      %c0_20 = arith.constant 0 : index
      %50 = vector.load %arg5[%c0_19, %c0_20] : memref<1x1xf32, #tpu.memory_space<vmem>>, vector<1x1xf32>
      tpu.vector_store %arg5[%c0_19, %c0_20], %49 {strides = array<i32>} : memref<1x1xf32, #tpu.memory_space<vmem>>, vector<1x1xf32>,
    } else {
    }
    %c0 = arith.constant 0 : index
    %c0_1 = arith.constant 0 : index
    %3 = vector.load %arg1[%c0, %c0_1] : memref<8x7xf32, #tpu.memory_space<vmem>>, vector<8x7xf32>
    %c0_2 = arith.constant 0 : index
    %c0_3 = arith.constant 0 : index
    %4 = vector.load %arg2[%c0_2, %c0_3] : memref<7x6xf32, #tpu.memory_space<vmem>>, vector<7x6xf32>
    %c0_4 = arith.constant 0 : index
    %c0_5 = arith.constant 0 : index
    %5 = vector.load %arg3[%c0_4, %c0_5] : memref<8x1xi32, #tpu.memory_space<vmem>>, vector<8x1xi32>
    %6 = arith.mulf %3, %3 : vector<8x7xf32>
    %cst = arith.constant dense<0.000000e+00> : vector<8xf32>
    %7 = vector.multi_reduction <add>, %6, %cst [1] : vector<8x7xf32> to vector<8xf32>
    %8 = vector.shape_cast %7 : vector<8xf32> to vector<8x1xf32>
    %9 = math.rsqrt %8 : vector<8x1xf32>
    %cst_6 = arith.constant dense<0.000000e+00> : vector<8x6xf32>
    %10 = tpu.matmul %3, %4, %cst_6 {dimension_numbers = #tpu.dot_dimension_numbers<[1], [0], [0], [1], [0, 0, 1, 1], [], []>} : vector<8x7xf32>, vector<7x6xf32>, vector<8x6xf32> -> vector<8x6xf32>
    %11 = vector.broadcast %9 : vector<8x1xf32> to vector<8x6xf32>
    %12 = arith.mulf %10, %11 : vector<8x6xf32>
    %cst_7 = arith.constant dense<0xFF800000> : vector<8xf32>
    %13 = vector.multi_reduction <maximumf>, %12, %cst_7 [1] : vector<8x6xf32> to vector<8xf32>
    %14 = vector.shape_cast %13 : vector<8xf32> to vector<8x1xf32>
    %15 = vector.broadcast %14 : vector<8x1xf32> to vector<8x6xf32>
    %16 = arith.subf %12, %15 : vector<8x6xf32>
    %17 = math.exp %16 : vector<8x6xf32>
    %cst_8 = arith.constant dense<0.000000e+00> : vector<8xf32>
    %18 = vector.multi_reduction <add>, %17, %cst_8 [1] : vector<8x6xf32> to vector<8xf32>
    %19 = vector.shape_cast %18 : vector<8xf32> to vector<8x1xf32>
    %20 = math.log %19 : vector<8x1xf32>
    %21 = arith.addf %14, %20 : vector<8x1xf32>
    %22 = tpu.iota {dimensions = array<i32: 1>} : vector<8x6xi32>
    %23 = vector.broadcast %5 : vector<8x1xi32> to vector<8x6xi32>
    %24 = arith.cmpi eq, %22, %23 : vector<8x6xi32>
    %cst_9 = arith.constant 0.000000e+00 : f32
    %25 = vector.broadcast %cst_9 : f32 to vector<8x6xf32>
    %26 = arith.select %24, %12, %25 : vector<8x6xi1>, vector<8x6xf32>
    %cst_10 = arith.constant dense<0.000000e+00> : vector<8xf32>
    %27 = vector.multi_reduction <add>, %26, %cst_10 [1] : vector<8x6xf32> to vector<8xf32>
    %28 = vector.shape_cast %27 : vector<8xf32> to vector<8x1xf32>
    %c8_i32 = arith.constant 8 : i32
    %29 = arith.muli %arg0, %c8_i32 : i32
    %30 = tpu.iota {dimensions = array<i32: 0>} : vector<8x1xi32>
    %31 = vector.broadcast %29 : i32 to vector<8x1xi32>
    %32 = arith.addi %31, %30 : vector<8x1xi32>
    %c16_i32 = arith.constant 16 : i32
    %33 = vector.broadcast %c16_i32 : i32 to vector<8x1xi32>
    %34 = arith.cmpi slt, %32, %33 : vector<8x1xi32>
    %35 = arith.subf %21, %28 : vector<8x1xf32>
    %cst_11 = arith.constant 0.000000e+00 : f32
    %36 = vector.broadcast %cst_11 : f32 to vector<8x1xf32>
    %37 = arith.select %34, %35, %36 : vector<8x1xi1>, vector<8x1xf32>
    %c0_12 = arith.constant 0 : index
    %c0_13 = arith.constant 0 : index
    %38 = vector.load %arg5[%c0_12, %c0_13] : memref<1x1xf32, #tpu.memory_space<vmem>>, vector<1x1xf32>
    %39 = vector.shape_cast %37 : vector<8x1xf32> to vector<1x8x1xf32>
    %cst_14 = arith.constant dense<0.000000e+00> : vector<1xf32>
    %40 = vector.multi_reduction <add>, %39, %cst_14 [1, 2] : vector<1x8x1xf32> to vector<1xf32>
    %41 = vector.shape_cast %40 : vector<1xf32> to vector<1x1x1xf32>
    %42 = vector.extract %41[0, 0, 0] : f32 from vector<1x1x1xf32>
    %43 = vector.broadcast %42 : f32 to vector<1x1xf32>
    %44 = arith.addf %38, %43 : vector<1x1xf32>
    %c0_15 = arith.constant 0 : index
    %c0_16 = arith.constant 0 : index
    %45 = vector.load %arg5[%c0_15, %c0_16] : memref<1x1xf32, #tpu.memory_space<vmem>>, vector<1x1xf32>
    tpu.vector_store %arg5[%c0_15, %c0_16], %44 {strides = array<i32>} : memref<1x1xf32, #tpu.memory_space<vmem>>, vector<1x1xf32>,
    %c1_i32 = arith.constant 1 : i32
    %46 = arith.cmpi eq, %arg0, %c1_i32 : i32
    %47 = arith.extui %46 : i1 to i32
    %c0_i32_17 = arith.constant 0 : i32
    %48 = arith.cmpi ne, %47, %c0_i32_17 : i32
    scf.if %48 {
      %c0_18 = arith.constant 0 : index
      %c0_19 = arith.constant 0 : index
      %49 = vector.load %arg5[%c0_18, %c0_19] : memref<1x1xf32, #tpu.memory_space<vmem>>, vector<1x1xf32>
      %cst_20 = arith.constant 1.600000e+01 : f32
      %50 = vector.broadcast %cst_20 : f32 to vector<1x1xf32>
      %51 = arith.divf %49, %50 : vector<1x1xf32>
      %c0_21 = arith.constant 0 : index
      %c0_22 = arith.constant 0 : index
      %52 = vector.load %arg4[%c0_21, %c0_22] : memref<1x1xf32, #tpu.memory_space<vmem>>, vector<1x1xf32>
      tpu.vector_store %arg4[%c0_21, %c0_22], %51 {strides = array<i32>} : memref<1x1xf32, #tpu.memory_space<vmem>>, vector<1x1xf32>,
    } else {
    }
    return
  }
  func.func @transform_0(%arg0: i32) -> (i32, i32) {
    %c0_i32 = arith.constant 0 : i32
    %c0_i32_0 = arith.constant 0 : i32
    return %arg0, %c0_i32 : i32, i32
  }
  func.func @transform_1(%arg0: i32) -> (i32, i32) {
    %c0_i32 = arith.constant 0 : i32
    %c0_i32_0 = arith.constant 0 : i32
    %c0_i32_1 = arith.constant 0 : i32
    return %c0_i32, %c0_i32_0 : i32, i32
  }
  func.func @transform_2(%arg0: i32) -> (i32, i32) {
    %c0_i32 = arith.constant 0 : i32
    %c0_i32_0 = arith.constant 0 : i32
    return %arg0, %c0_i32 : i32, i32
  }
  func.func @transform_3(%arg0: i32) -> (i32, i32) {
    %c0_i32 = arith.constant 0 : i32
    %c0_i32_0 = arith.constant 0 : i32
    %c0_i32_1 = arith.constant 0 : i32
    return %c0_i32, %c0_i32_0 : i32, i32
  }
}

</mosaic_0001>

<llo_original>
// kernel: tpu_custom_call.1
$region0: #{tpu_custom_call.1}
  #allocation0 [shape = 'u32[]', space=smem, size = 0x4, offset = 0x4, fixed_abs, tag = 'smem constant byte address 0x4 - core index']
  #allocation1 [shape = 'u32[144,128]{1,0:T(1,128)}', space=vmem, size = 0x12000, scoped, tag = 'internal scratch']
  #allocation2 [shape = 'f32[1,1]{1,0:T(1,128)}', space=vmem, size = 0x200, scoped, tag = 'scratch operand']
  %s0 = inlined_call_operand.vmem [shape: f32[16,7], index: 0, kind: input, shape index: {}]
  %s1 = inlined_call_operand.vmem [shape: f32[7,6], index: 1, kind: input, shape index: {}]
  %s2 = inlined_call_operand.vmem [shape: s32[16,1], index: 2, kind: input, shape index: {}]
  %s3 = inlined_call_operand.hbm [shape: f32[1,1], index: 3, kind: output, shape index: {}]
  %s4 = sld [smem:[#allocation0]]
  $region53: #{tpu_custom_call.1} parent=0
    _
  %s6 = ssub.s32 1, %s4
  %s7 = scalar_select 0, %s6, %s4
  $region1: #{tpu_custom_call.1} parent=0
    #allocation3 [shape = 'u8[512]{0}', space=vmem, size = 0x400, scoped, tag = 'output window, operand 0, single buffered']
    #allocation4 [shape = 's32[2]{0}', space=sflag, size = 0x8, scoped, tag = 'scoped memory for tpu_custom_call.1']
    %8 = vsyncpa [#allocation4], 0
    loop: start=0, step=1, limit=4
    $region2: #{tpu_custom_call.1} parent=1 // loop_pre_header
      _
    $region3: #{tpu_custom_call.1} parent=1 // loop_header
      %s10 = sphi 0, %s14
      %p11 = scmp.ge.s32.totalorder %s10, 4
      %s20 = sphi 0, %s22
      %s23 = sphi 0, %s20
      %s24 = sphi 0, %s23
      %s40 = sphi 0, %s24
      %s44 = sphi 0, %s44
      %s46 = sphi 0, %s44
      %s47 = sphi 0, %s46
      %s61 = sphi 0, %s47
      %s67 = sphi 0, %s69
      %s70 = sphi 0, %s67
      %s71 = sphi 0, %s70
      %s87 = sphi 0, %s71
      %s91 = sphi 0, %s91
      %s93 = sphi 0, %s91
      %s94 = sphi 0, %s93
      %s108 = sphi 0, %s94
    $region4: #{tpu_custom_call.1} parent=1 // loop_header_branch
      %13 = sbr.rel (%p11) target = $region8
    $region5: #{tpu_custom_call.1} parent=1 // loop_body
      %s15 = ssub.s32 %s10, 1
      %s16 = ssub.s32 %s10, 2
      %s17 = sadd.s32 %s10, 1
      %s18 = ssub.s32 %s10, %s17
      %p19 = scmp.eq.s32.totalorder %s18, 0
      %s21 = sadd.s32 %s20, 1
      %s22 = scalar_select %p19, %s20, %s21
      %p25 = pneg %p19
      %p26 = scmp.eq.s32.totalorder %s10, 1
      %p27 = por %p25, %p26
      %p28 = scmp.ne.s32.totalorder %s20, %s23
      %p29 = scmp.eq.s32.totalorder %s10, 0
      %p30 = por %p28, %p29
      %p31 = scmp.ne.s32.totalorder %s20, %s23
      %p32 = scmp.eq.s32.totalorder %s15, 1
      %p33 = por %p31, %p32
      %p34 = scmp.ne.s32.totalorder %s23, %s24
      %p35 = scmp.eq.s32.totalorder %s15, 0
      %p36 = por %p34, %p35
      %p37 = scmp.ne.s32.totalorder %s23, %s24
      %p38 = scmp.eq.s32.totalorder %s16, 1
      %p39 = por %p37, %p38
      %p41 = scmp.ne.s32.totalorder %s24, %s40
      %p42 = scmp.eq.s32.totalorder %s16, 0
      %p43 = por %p41, %p42
      %s45 = sadd.s32 %s44, 1
      %p48 = scmp.eq.s32.totalorder %s10, 1
      %p49 = scmp.ne.s32.totalorder %s44, %s46
      %p50 = scmp.eq.s32.totalorder %s10, 0
      %p51 = por %p49, %p50
      %p52 = scmp.ne.s32.totalorder %s44, %s46
      %p53 = scmp.eq.s32.totalorder %s15, 1
      %p54 = por %p52, %p53
      %p55 = scmp.ne.s32.totalorder %s46, %s47
      %p56 = scmp.eq.s32.totalorder %s15, 0
      %p57 = por %p55, %p56
      %p58 = scmp.ne.s32.totalorder %s46, %s47
      %p59 = scmp.eq.s32.totalorder %s16, 1
      %p60 = por %p58, %p59
      %p62 = scmp.ne.s32.totalorder %s47, %s61
      %p63 = scmp.eq.s32.totalorder %s16, 0
      %p64 = por %p62, %p63
      %s65 = ssub.s32 %s10, %s17
      %p66 = scmp.eq.s32.totalorder %s65, 0
      %s68 = sadd.s32 %s67, 1
      %s69 = scalar_select %p66, %s67, %s68
      %p72 = pneg %p66
      %p73 = scmp.eq.s32.totalorder %s10, 1
      %p74 = por %p72, %p73
      %p75 = scmp.ne.s32.totalorder %s67, %s70
      %p76 = scmp.eq.s32.totalorder %s10, 0
      %p77 = por %p75, %p76
      %p78 = scmp.ne.s32.totalorder %s67, %s70
      %p79 = scmp.eq.s32.totalorder %s15, 1
      %p80 = por %p78, %p79
      %p81 = scmp.ne.s32.totalorder %s70, %s71
      %p82 = scmp.eq.s32.totalorder %s15, 0
      %p83 = por %p81, %p82
      %p84 = scmp.ne.s32.totalorder %s70, %s71
      %p85 = scmp.eq.s32.totalorder %s16, 1
      %p86 = por %p84, %p85
      %p88 = scmp.ne.s32.totalorder %s71, %s87
      %p89 = scmp.eq.s32.totalorder %s16, 0
      %p90 = por %p88, %p89
      %s92 = sadd.s32 %s91, 1
      %p95 = scmp.eq.s32.totalorder %s10, 1
      %p96 = scmp.ne.s32.totalorder %s91, %s93
      %p97 = scmp.eq.s32.totalorder %s10, 0
      %p98 = por %p96, %p97
      %p99 = scmp.ne.s32.totalorder %s91, %s93
      %p100 = scmp.eq.s32.totalorder %s15, 1
      %p101 = por %p99, %p100
      %p102 = scmp.ne.s32.totalorder %s93, %s94
      %p103 = scmp.eq.s32.totalorder %s15, 0
      %p104 = por %p102, %p103
      %p105 = scmp.ne.s32.totalorder %s93, %s94
      %p106 = scmp.eq.s32.totalorder %s16, 1
      %p107 = por %p105, %p106
      %p109 = scmp.ne.s32.totalorder %s94, %s108
      %p110 = scmp.eq.s32.totalorder %s16, 0
      %p111 = por %p109, %p110
      %p112 = scmp.le.s32.totalorder 1, %s10
      %p113 = scmp.lt.s32.totalorder %s10, 3
      %p114 = pnand %p112, %p113
      %p115 = pneg %p114
      // Predicated region
      $region9: #{tpu_custom_call.1} parent=5 // pred_check
        _
      $region10: #{tpu_custom_call.1} parent=5 // pred_check_branch
        %117 = sbr.rel (%p114) target = $region12
      $region11: #{tpu_custom_call.1} parent=5 // pred_region
        %s118 = ssub.s32 %s10, 1
        // Predicated region
        $region13: #{tpu_custom_call.1} parent=11 // pred_check
          %p119 = pneg %p57
        $region14: #{tpu_custom_call.1} parent=11 // pred_check_branch
          %121 = sbr.rel (%p119) target = $region16
        $region15: #{tpu_custom_call.1} parent=11 // pred_region
          _
        $region16: #{tpu_custom_call.1} parent=11 // pred_fallthru
          _
      $region12: #{tpu_custom_call.1} parent=5 // pred_fallthru
        _
      %p122 = scmp.lt.s32.totalorder %s10, 2
      // Predicated region
      $region17: #{tpu_custom_call.1} parent=5 // pred_check
        %p123 = pneg %p122
      $region18: #{tpu_custom_call.1} parent=5 // pred_check_branch
        %125 = sbr.rel (%p123) target = $region20
      $region19: #{tpu_custom_call.1} parent=5 // pred_region
        // Predicated region
        $region21: #{tpu_custom_call.1} parent=19 // pred_check
          %p126 = pneg %p30
        $region22: #{tpu_custom_call.1} parent=19 // pred_check_branch
          %128 = sbr.rel (%p126) target = $region24
        $region23: #{tpu_custom_call.1} parent=19 // pred_region
          %p129 = scmp.lt.s32.totalorder %s10, 1
          %s130 = scalar_select %p129, %s10, 1
          %s131 = smul.addr %s130, 8
          %s132 = scalar_lea.vmem %s0, %s131
        $region24: #{tpu_custom_call.1} parent=19 // pred_fallthru
          _
        // Predicated region
        $region25: #{tpu_custom_call.1} parent=19 // pred_check
          %p133 = pneg %p77
        $region26: #{tpu_custom_call.1} parent=19 // pred_check_branch
          %135 = sbr.rel (%p133) target = $region28
        $region27: #{tpu_custom_call.1} parent=19 // pred_region
          %p136 = scmp.lt.s32.totalorder %s10, 1
          %s137 = scalar_select %p136, %s10, 1
          %s138 = smul.addr %s137, 8
          %s139 = scalar_lea.vmem %s2, %s138
        $region28: #{tpu_custom_call.1} parent=19 // pred_fallthru
          _
      $region20: #{tpu_custom_call.1} parent=5 // pred_fallthru
        _
      %p140 = scmp.le.s32.totalorder 1, %s10
      %p141 = scmp.lt.s32.totalorder %s10, 3
      %p142 = pnand %p140, %p141
      %p143 = pneg %p142
      // Predicated region
      $region29: #{tpu_custom_call.1} parent=5 // pred_check
        _
      $region30: #{tpu_custom_call.1} parent=5 // pred_check_branch
        %145 = sbr.rel (%p142) target = $region32
      $region31: #{tpu_custom_call.1} parent=5 // pred_region
        %s146 = ssub.s32 %s10, 1
        %p147 = scmp.lt.s32.totalorder %s15, 1
        %s148 = scalar_select %p147, %s15, 1
        %s149 = smul.addr %s148, 8
        %s150 = scalar_lea.vmem %s0, %s149
        %p151 = pneg %p36
        %p152 = pneg %p33
        %p153 = pneg %p57
        %p154 = pneg %p54
        %p155 = scmp.lt.s32.totalorder %s15, 1
        %s156 = scalar_select %p155, %s15, 1
        %s157 = smul.addr %s156, 8
        %s158 = scalar_lea.vmem %s2, %s157
        %p159 = pneg %p83
        %p160 = pneg %p80
        %p161 = pneg %p104
        %p162 = pneg %p101
        %p163 = scmp.lt.s32.totalorder %s15, 1
        %s164 = scalar_select %p163, %s15, 1
        %s165 = smul.addr %s164, 8
        %s166 = scalar_lea.vmem %s0, %s165
        %p167 = scmp.lt.s32.totalorder %s15, 1
        %s168 = scalar_select %p167, %s15, 1
        %s169 = smul.addr %s168, 8
        %s170 = scalar_lea.vmem %s2, %s169
        %p171 = scmp.eq.s32.totalorder %s15, 0
        // Predicated region
        $region33: #{tpu_custom_call.1} parent=31 // pred_check
          %p172 = pneg %p171
        $region34: #{tpu_custom_call.1} parent=31 // pred_check_branch
          %174 = sbr.rel (%p172) target = $region36
        $region35: #{tpu_custom_call.1} parent=31 // pred_region
          %vm175 = vcmask 0
          %176 = vst.msk [vmem:[#allocation2] sm:$0x1] %vm175, 0.0
        $region36: #{tpu_custom_call.1} parent=31 // pred_fallthru
          _
        %v177 = vld [vmem:[%s166] sm:$0xff]
        %v178 = vld [vmem:[%s1] sm:$0x7f]
        %v179 = vld [vmem:[%s170] sm:$0xff]
        %v180 = vmul.f32 %v177, %v177
        %vm181 = vcmask 56320
        %v182 = vsel %vm181, %v180, 0.0
        %183 = vadd.xlane.f32.xlu0 %v182
        %v184 = vpop.xlane.xlu0 %183
        %v185 = vrsqrt.pop %v184
        %v187 = vsel %vm181, %v177, 0
        %vm189 = vcmask 1046528
        %v191 = vsel %vm189, %v178, 0
        %193 = vmatprep.subr.mxu0 0.0
        %194 = vmatpush1.msra.mxu0 %v191
        %195 = vmatprep.subr.mxu0 0.0
        %196 = vmatpush1.msra.mxu0 0.0
        %197 = vmatprep.subr.mxu0 0.0
        %198 = vmatpush1.msra.mxu0 0.0
        %199 = vmatprep.subr.mxu0 0.0
        %200 = vmatpush1.msra.mxu0 0.0
        %201 = vmatprep.subr.mxu0 0.0
        %202 = vmatpush1.msra.mxu0 0.0
        %203 = vmatprep.subr.mxu0 0.0
        %204 = vmatpush1.msra.mxu0 0.0
        %205 = vmatprep.subr.mxu0 0.0
        %206 = vmatpush1.msra.mxu0 0.0
        %207 = vmatprep.subr.mxu0 0.0
        %208 = vmatpush1.msra.mxu0 0.0
        %209 = vmatprep.subr.mxu0 0.0
        %210 = vmatpush1.msra.mxu0 0.0
        %211 = vmatprep.subr.mxu0 0.0
        %212 = vmatpush1.msra.mxu0 0.0
        %213 = vmatprep.subr.mxu0 0.0
        %214 = vmatpush1.msra.mxu0 0.0
        %215 = vmatprep.subr.mxu0 0.0
        %216 = vmatpush1.msra.mxu0 0.0
        %217 = vmatprep.subr.mxu0 0.0
        %218 = vmatpush1.msra.mxu0 0.0
        %219 = vmatprep.subr.mxu0 0.0
        %220 = vmatpush1.msra.mxu0 0.0
        %221 = vmatprep.subr.mxu0 0.0
        %222 = vmatpush1.msra.mxu0 0.0
        %223 = vmatprep.subr.mxu0 0.0
        %224 = vmatpush1.msra.mxu0 0.0
        %225 = vmatprep.subr.mxu0 0.0
        %226 = vmatpush1.msra.mxu0 0.0
        %227 = vmatprep.subr.mxu0 0.0
        %228 = vmatpush1.msra.mxu0 0.0
        %229 = vmatprep.subr.mxu0 0.0
        %230 = vmatpush1.msra.mxu0 0.0
        %231 = vmatprep.subr.mxu0 0.0
        %232 = vmatpush1.msra.mxu0 0.0
        %233 = vmatprep.subr.mxu0 0.0
        %234 = vmatpush1.msra.mxu0 0.0
        %235 = vmatprep.subr.mxu0 0.0
        %236 = vmatpush1.msra.mxu0 0.0
        %237 = vmatprep.subr.mxu0 0.0
        %238 = vmatpush1.msra.mxu0 0.0
        %239 = vmatprep.subr.mxu0 0.0
        %240 = vmatpush1.msra.mxu0 0.0
        %241 = vmatprep.subr.mxu0 0.0
        %242 = vmatpush1.msra.mxu0 0.0
        %243 = vmatprep.subr.mxu0 0.0
        %244 = vmatpush1.msra.mxu0 0.0
        %245 = vmatprep.subr.mxu0 0.0
        %246 = vmatpush1.msra.mxu0 0.0
        %247 = vmatprep.subr.mxu0 0.0
        %248 = vmatpush1.msra.mxu0 0.0
        %249 = vmatprep.subr.mxu0 0.0
        %250 = vmatpush1.msra.mxu0 0.0
        %251 = vmatprep.subr.mxu0 0.0
        %252 = vmatpush1.msra.mxu0 0.0
        %253 = vmatprep.subr.mxu0 0.0
        %254 = vmatpush1.msra.mxu0 0.0
        %255 = vmatprep.subr.mxu0 0.0
        %256 = vmatpush1.msra.mxu0 0.0
        %257 = vmatprep.mubr.f32.mxu0 0.0
        %258 = vmatmul.mubr.f32.gmra.mrb[0].mxu0 %v187
        %v259 = vpop.f32.mrb[0].mxu0
        %v260 = vadd.f32 0.0, %v259
        %v261 = vpop.f32.mrb[0].mxu0
        %262 = vdwg.mxu0
        %v263 = vmul.f32 %v260, %v185
        %vm264 = vcmask 48128
        %v265 = vsel %vm264, %v263, -inf
        %266 = vmax.xlane.f32.xlu0 %v265
        %v267 = vpop.xlane.xlu0 %266
        %v268 = vsub.f32 %v263, %v267
        %v269 = vmul.f32 %v268, 1.442695
        %v270 = vpow.pop %v269
        %v271 = vsel %vm264, %v270, 0.0
        %272 = vadd.xlane.f32.xlu0 %v271
        %v273 = vpop.xlane.xlu0 %272
        %v274 = vlog2.pop %v273
        %v275 = vmul.f32 %v274, 0.6931472
        %v276 = vadd.f32 %v267, %v275
        %v277 = vlaneseq
        %v278 = vand.u32 %v277, 127
        %279 = vset.pattern.permute.xlu0 0
        %280 = vperm.xlu0 %279, %v179
        %v281 = vpop.permute.xlu0 %280
        %vm282 = vcmp.eq.s32.totalorder %v278, %v281
        %v283 = vsel %vm282, %v263, 0.0
        %v284 = vsel %vm264, %v283, 0.0
        %285 = vadd.xlane.f32.xlu0 %v284
        %v286 = vpop.xlane.xlu0 %285
        %s287 = smul.u32 %s15, 8
        %v288 = vlaneseq
        %v289 = vshrl.u32 %v288, 7
        %v290 = vstv %s287
        %v291 = vadd.s32 %v290, %v289
        %vm292 = vcmp.lt.s32.totalorder %v291, 16
        %v293 = vsub.f32 %v276, %v286
        %v294 = vsel %vm292, %v293, 0.0
        %v295 = vld [vmem:[#allocation2] sm:$0x1]
        %vm296 = vcmask 7168
        %v297 = vsel %vm296, %v294, 0.0
        %298 = vadd.xlane.f32.xlu0 %v297
        %v299 = vpop.xlane.xlu0 %298
        %v300 = vrot.slane %v299, 4
        %v301 = vadd.f32 %v299, %v300
        %v302 = vrot.slane %v301, 2
        %v303 = vadd.f32 %v301, %v302
        %v304 = vrot.slane %v303, 1
        %v305 = vadd.f32 %v303, %v304
        %s306 = vtos %v305
        %v307 = vstv %s306
        %v308 = vadd.f32 %v295, %v307
        %vm309 = vcmask 0
        %310 = vst.msk [vmem:[#allocation2] sm:$0x1] %vm309, %v308
        %p311 = scmp.eq.s32.totalorder %s15, 1
        // Predicated region
        $region37: #{tpu_custom_call.1} parent=31 // pred_check
          %p312 = pneg %p311
        $region38: #{tpu_custom_call.1} parent=31 // pred_check_branch
          %314 = sbr.rel (%p312) target = $region40
        $region39: #{tpu_custom_call.1} parent=31 // pred_region
          %v315 = vld [vmem:[#allocation2] sm:$0x1]
          %v316 = vrcp.pop 16.0
          %v317 = vmul.f32 %v315, %v316
          %318 = vst.msk [vmem:[#allocation3] sm:$0x1] %vm309, %v317
        $region40: #{tpu_custom_call.1} parent=31 // pred_fallthru
          _
        // Predicated region
        $region41: #{tpu_custom_call.1} parent=31 // pred_check
          %p319 = pneg %p101
        $region42: #{tpu_custom_call.1} parent=31 // pred_check_branch
          %321 = sbr.rel (%p319) target = $region44
        $region43: #{tpu_custom_call.1} parent=31 // pred_region
          %s323 = ssub.s32 16, 16
          %324 = vsyncadd [#allocation4], %s323
          %s326 = sshll.u32 [#allocation3], 4
          %s327 = int_to_ptr.vmem [resolvable:$true] %s326
          %329 = dma.vmem_to_hbm [thread:$0]  %s327, 16, %s3, [#allocation4]
        $region44: #{tpu_custom_call.1} parent=31 // pred_fallthru
          _
        // Predicated region
        $region45: #{tpu_custom_call.1} parent=31 // pred_check
          %p330 = pneg %p101
        $region46: #{tpu_custom_call.1} parent=31 // pred_check_branch
          %332 = sbr.rel (%p330) target = $region48
        $region47: #{tpu_custom_call.1} parent=31 // pred_region
          %333 = dma.done [#allocation4], 16
        $region48: #{tpu_custom_call.1} parent=31 // pred_fallthru
          _
      $region32: #{tpu_custom_call.1} parent=5 // pred_fallthru
        _
      %p334 = scmp.le.s32.totalorder 2, %s10
      // Predicated region
      $region49: #{tpu_custom_call.1} parent=5 // pred_check
        %p335 = pneg %p334
      $region50: #{tpu_custom_call.1} parent=5 // pred_check_branch
        %337 = sbr.rel (%p335) target = $region52
      $region51: #{tpu_custom_call.1} parent=5 // pred_region
        %s338 = ssub.s32 %s10, 2
      $region52: #{tpu_custom_call.1} parent=5 // pred_fallthru
        _
    $region6: #{tpu_custom_call.1} parent=1 // loop_footer
      %s14 = sadd.s32 1, %s10
    $region7: #{tpu_custom_call.1} parent=1 // loop_footer_branch
      %9 = sbr.rel target = $region3
    $region8: #{tpu_custom_call.1} parent=1 // loop_exit
      _
    %339 = vsyncpa [#allocation4], 1
    %s340 = scalar_lea.sflag [#allocation4], 1
    %341 = vsyncpa %s340, 1

</llo_original>
